<compile_context>
chip_gen: v7x
topology: tpu7x:2x2x1
jax: 0.10.0
libtpu: 0.0.40
codegen_flags: <defaults>
</compile_context>

<pallas_src>
import jax
import jax.numpy as jnp
from jax.experimental import pallas as pl
from jax.experimental.pallas import tpu as pltpu

LANE = 128
SUBLANE = 8


def _round_up(v, m):
    return (v + m - 1) // m * m


def _pick_tile_k(h, max_tile_k=2048):
    """Largest K tile <= max_tile_k that divides H exactly (multiple of 128).

    An exact divisor avoids a ragged K block: out-of-bounds reads return
    unspecified data, which on the *reduction* axis would pollute the
    accumulator.  (Ragged batch blocks are fine: garbage rows are discarded.)
    """
    if h <= max_tile_k:
        return h
    for t in range(max_tile_k, LANE - 1, -LANE):
        if h % t == 0:
            return t
    return h  # no aligned divisor; fall back to a single K block


def temp_scaled_logits_kernel(temp_ref, x_ref, w_ref, b_ref, o_ref, acc_ref):
    """One (batch-tile, K-tile) grid step: acc += x @ W; epilogue adds b, * 1/T."""
    k = pl.program_id(1)

    @pl.when(k == 0)
    def _init():
        acc_ref[...] = jnp.zeros_like(acc_ref)

    # MXU matmul, f32 accumulation regardless of input dtype (bf16 or f32).
    acc_ref[...] += jnp.dot(x_ref[...], w_ref[...],
                            preferred_element_type=jnp.float32)

    @pl.when(k == pl.num_programs(1) - 1)
    def _finalize():
        # ModelWithTemperature.temperature_scale: logits / temperature.
        # One scalar reciprocal (SMEM scalar) + a vector multiply.
        inv_t = 1.0 / temp_ref[0]
        o_ref[...] = ((acc_ref[...] + b_ref[...]) * inv_t).astype(o_ref.dtype)


def model_with_temperature_forward(x, w, b, temperature, *, tile_b=None,
                                   tile_k=None, compute_dtype=jnp.bfloat16,
                                   out_dtype=jnp.float32):
    """x: [B, H], w: [H, C], b: [1, C], temperature: [1] f32.

    Returns a lane-dense [B, C_pad] array (C_pad = round_up(C, 128)); columns
    >= C are padding for the consumer to ignore / slice lazily (avoids an
    extra HBM pass materializing out[:, :C]).
    """
    B, H = x.shape
    C = w.shape[1]
    C_pad = _round_up(C, LANE)   # minimum unmasked-vst width; do NOT pad to 256

    # bf16 on the HBM->VMEM path halves the input traffic of this mem-bound
    # kernel.  Ideally the producer already emits bf16 (as in __main__ below);
    # these casts are a fallback and no-ops in that case.
    if compute_dtype is not None:
        if x.dtype != compute_dtype:
            x = x.astype(compute_dtype)
        if w.dtype != compute_dtype:
            w = w.astype(compute_dtype)
    if b.dtype != jnp.float32:
        b = b.astype(jnp.float32)

    if C_pad != C:   # W/b are tiny; this pad is negligible vs. the activations
        w = jnp.pad(w, ((0, 0), (0, C_pad - C)))
        b = jnp.pad(b, ((0, 0), (0, C_pad - C)))

    if tile_k is None:
        tile_k = _pick_tile_k(H)
    if tile_b is None:
        tile_b = min(_round_up(B, SUBLANE), 1024)   # sweep 512-2048 on v7x

    grid = (pl.cdiv(B, tile_b), pl.cdiv(H, tile_k))

    in_itemsize = jnp.dtype(x.dtype).itemsize
    out_itemsize = jnp.dtype(out_dtype).itemsize
    # Explicit scoped-VMEM budget: double-buffered x/W/b/out + f32 accumulator.
    vmem_bytes = (2 * tile_b * tile_k * in_itemsize      # x double buffer
                  + 2 * tile_k * C_pad * in_itemsize     # W double buffer
                  + 2 * C_pad * 4                        # b double buffer
                  + 2 * tile_b * C_pad * out_itemsize    # out double buffer
                  + tile_b * C_pad * 4)                  # accumulator scratch
    vmem_limit = int(min(max(1.5 * vmem_bytes + (2 << 20), 16 << 20), 96 << 20))

    out = pl.pallas_call(
        temp_scaled_logits_kernel,
        out_shape=jax.ShapeDtypeStruct((B, C_pad), out_dtype),
        grid=grid,
        in_specs=[
            pl.BlockSpec(memory_space=pltpu.MemorySpace.SMEM),     # temperature
            pl.BlockSpec((tile_b, tile_k), lambda i, k: (i, k)),   # x tile
            pl.BlockSpec((tile_k, C_pad), lambda i, k: (k, 0)),    # W K-slab
            pl.BlockSpec((1, C_pad), lambda i, k: (0, 0)),         # b resident
        ],
        out_specs=pl.BlockSpec((tile_b, C_pad), lambda i, k: (i, 0)),
        scratch_shapes=[pltpu.VMEM((tile_b, C_pad), jnp.float32)],
        compiler_params=pltpu.CompilerParams(
            dimension_semantics=("parallel", "arbitrary"),
            vmem_limit_bytes=vmem_limit,
        ),
        cost_estimate=pl.CostEstimate(
            flops=2 * B * H * C_pad,
            transcendentals=0,
            bytes_accessed=(B * H * in_itemsize          # x read
                            + H * C_pad * in_itemsize    # W read
                            + C_pad * 4                  # b read
                            + B * C_pad * out_itemsize), # output write
        ),
    )(temperature, x, w, b)

    return out


if __name__ == "__main__":
    key = jax.random.PRNGKey(0)
    kx, kw, kb = jax.random.split(key, 3)

    # Small, tiling-exercising shapes: B=20 with tile_b=8 -> 3 batch tiles,
    # the last one ragged (no jnp.pad of x; OOB rows are discarded by Pallas).
    B, H, C = 20, 128, 2
    x_f32 = jax.random.normal(kx, (B, H), dtype=jnp.float32)
    w_f32 = 0.1 * jax.random.normal(kw, (H, C), dtype=jnp.float32)
    b = 0.1 * jax.random.normal(kb, (1, C), dtype=jnp.float32)
    # nn.Parameter(torch.ones(1)) initializes temperature to 1.0; use a
    # non-trivial value here so the scaling path is actually exercised.
    temperature = jnp.full((1,), 1.5, dtype=jnp.float32)

    # Producer emits bf16 activations/weights (the perf-relevant path);
    # the kernel accumulates in f32 on the MXU.
    x = x_f32.astype(jnp.bfloat16)
    w = w_f32.astype(jnp.bfloat16)

    out_padded = model_with_temperature_forward(x, w, b, temperature, tile_b=8)
    out_padded = jax.block_until_ready(out_padded)
    assert out_padded.shape == (B, 128) and out_padded.dtype == jnp.float32
    out = out_padded[:, :C]   # consumer-side lazy slice of the lane padding

    # Reference with the same bf16 inputs / f32 accumulation.
    ref = (x.astype(jnp.float32) @ w.astype(jnp.float32) + b) / temperature[0]
    assert jnp.allclose(out, ref, atol=1e-4, rtol=1e-4)
    # Loose check against full-f32 math (difference is bf16 input quantization).
    ref_f32 = (x_f32 @ w_f32 + b) / temperature[0]
    assert jnp.allclose(out, ref_f32, atol=5e-2, rtol=5e-2)

    # TODO(synk): set_temperature (LBFGS NLL tuning over a validation loader)
    # is host-side training logic on cached logits, not part of forward; it is
    # intentionally not implemented as a kernel.
    print("KERNEL_OK")
</pallas_src>

<mosaic_0001>
module attributes {stable_mosaic.version = 11 : i64} {
  func.func @temp_scaled_logits_kernel(%arg0: i32, %arg1: i32, %arg2: memref<1xf32, #tpu.memory_space<smem>>, %arg3: memref<8x128xbf16, #tpu.memory_space<vmem>>, %arg4: memref<128x128xbf16, #tpu.memory_space<vmem>>, %arg5: memref<1x128xf32, #tpu.memory_space<vmem>>, %arg6: memref<8x128xf32, #tpu.memory_space<vmem>>, %arg7: memref<8x128xf32, #tpu.memory_space<vmem>>) attributes {dimension_semantics = [#tpu.dimension_semantics<parallel>, #tpu.dimension_semantics<arbitrary>], iteration_bounds = array<i64: 3, 1>, scalar_prefetch = 0 : i64, scratch_operands = 1 : i64, tpu.core_type = #tpu.core_type<tc>, window_params = [{transform_indices = @transform_0, window_bounds = array<i64: 1>}, {transform_indices = @transform_1, window_bounds = array<i64: 8, 128>}, {transform_indices = @transform_2, window_bounds = array<i64: 128, 128>}, {pipeline_mode = #tpu.pipeline_mode<synchronous>, transform_indices = @transform_3, window_bounds = array<i64: 1, 128>}, {transform_indices = @transform_4, window_bounds = array<i64: 8, 128>}]} {
    %c0_i32 = arith.constant 0 : i32
    %0 = arith.cmpi eq, %arg1, %c0_i32 : i32
    %1 = arith.extui %0 : i1 to i32
    %c0_i32_0 = arith.constant 0 : i32
    %2 = arith.cmpi ne, %1, %c0_i32_0 : i32
    scf.if %2 {
      %cst_10 = arith.constant 0.000000e+00 : f32
      %12 = vector.broadcast %cst_10 : f32 to vector<8x128xf32>
      %c0_11 = arith.constant 0 : index
      %c0_12 = arith.constant 0 : index
      %13 = vector.load %arg7[%c0_11, %c0_12] : memref<8x128xf32, #tpu.memory_space<vmem>>, vector<8x128xf32>
      tpu.vector_store %arg7[%c0_11, %c0_12], %12 {strides = array<i32>} : memref<8x128xf32, #tpu.memory_space<vmem>>, vector<8x128xf32>,
    } else {
    }
    %c0 = arith.constant 0 : index
    %c0_1 = arith.constant 0 : index
    %3 = vector.load %arg7[%c0, %c0_1] : memref<8x128xf32, #tpu.memory_space<vmem>>, vector<8x128xf32>
    %c0_2 = arith.constant 0 : index
    %c0_3 = arith.constant 0 : index
    %4 = vector.load %arg3[%c0_2, %c0_3] : memref<8x128xbf16, #tpu.memory_space<vmem>>, vector<8x128xbf16>
    %c0_4 = arith.constant 0 : index
    %c0_5 = arith.constant 0 : index
    %5 = vector.load %arg4[%c0_4, %c0_5] : memref<128x128xbf16, #tpu.memory_space<vmem>>, vector<128x128xbf16>
    %cst = arith.constant dense<0.000000e+00> : vector<8x128xf32>
    %6 = tpu.matmul %4, %5, %cst {dimension_numbers = #tpu.dot_dimension_numbers<[1], [0], [0], [1], [0, 0, 1, 1], [], []>} : vector<8x128xbf16>, vector<128x128xbf16>, vector<8x128xf32> -> vector<8x128xf32>
    %7 = arith.addf %3, %6 : vector<8x128xf32>
    %c0_6 = arith.constant 0 : index
    %c0_7 = arith.constant 0 : index
    %8 = vector.load %arg7[%c0_6, %c0_7] : memref<8x128xf32, #tpu.memory_space<vmem>>, vector<8x128xf32>
    tpu.vector_store %arg7[%c0_6, %c0_7], %7 {strides = array<i32>} : memref<8x128xf32, #tpu.memory_space<vmem>>, vector<8x128xf32>,
    %c0_i32_8 = arith.constant 0 : i32
    %9 = arith.cmpi eq, %arg1, %c0_i32_8 : i32
    %10 = arith.extui %9 : i1 to i32
    %c0_i32_9 = arith.constant 0 : i32
    %11 = arith.cmpi ne, %10, %c0_i32_9 : i32
    scf.if %11 {
      %c0_10 = arith.constant 0 : index
      %12 = memref.load %arg2[%c0_10] : memref<1xf32, #tpu.memory_space<smem>>
      %cst_11 = arith.constant 1.000000e+00 : f32
      %13 = arith.divf %cst_11, %12 : f32
      %c0_12 = arith.constant 0 : index
      %c0_13 = arith.constant 0 : index
      %14 = vector.load %arg7[%c0_12, %c0_13] : memref<8x128xf32, #tpu.memory_space<vmem>>, vector<8x128xf32>
      %c0_14 = arith.constant 0 : index
      %c0_15 = arith.constant 0 : index
      %15 = vector.load %arg5[%c0_14, %c0_15] : memref<1x128xf32, #tpu.memory_space<vmem>>, vector<1x128xf32>
      %16 = vector.broadcast %15 : vector<1x128xf32> to vector<8x128xf32>
      %17 = arith.addf %14, %16 : vector<8x128xf32>
      %18 = vector.broadcast %13 : f32 to vector<8x128xf32>
      %19 = arith.mulf %17, %18 : vector<8x128xf32>
      %c0_16 = arith.constant 0 : index
      %c0_17 = arith.constant 0 : index
      %20 = vector.load %arg6[%c0_16, %c0_17] : memref<8x128xf32, #tpu.memory_space<vmem>>, vector<8x128xf32>
      tpu.vector_store %arg6[%c0_16, %c0_17], %19 {strides = array<i32>} : memref<8x128xf32, #tpu.memory_space<vmem>>, vector<8x128xf32>,
    } else {
    }
    return
  }
  func.func @transform_0(%arg0: i32, %arg1: i32) -> i32 {
    %c0_i32 = arith.constant 0 : i32
    %c0_i32_0 = arith.constant 0 : i32
    return %c0_i32 : i32
  }
  func.func @transform_1(%arg0: i32, %arg1: i32) -> (i32, i32) {
    %c0_i32 = arith.constant 0 : i32
    return %arg0, %arg1 : i32, i32
  }
  func.func @transform_2(%arg0: i32, %arg1: i32) -> (i32, i32) {
    %c0_i32 = arith.constant 0 : i32
    %c0_i32_0 = arith.constant 0 : i32
    return %arg1, %c0_i32 : i32, i32
  }
  func.func @transform_3(%arg0: i32, %arg1: i32) -> (i32, i32) {
    %c0_i32 = arith.constant 0 : i32
    %c0_i32_0 = arith.constant 0 : i32
    %c0_i32_1 = arith.constant 0 : i32
    return %c0_i32, %c0_i32_0 : i32, i32
  }
  func.func @transform_4(%arg0: i32, %arg1: i32) -> (i32, i32) {
    %c0_i32 = arith.constant 0 : i32
    %c0_i32_0 = arith.constant 0 : i32
    return %arg0, %c0_i32 : i32, i32
  }
}

</mosaic_0001>

<llo_original>
// kernel: tpu_custom_call.1
$region0: #{tpu_custom_call.1}
  #allocation0 [shape = 'u32[]', space=smem, size = 0x4, offset = 0x4, fixed_abs, tag = 'smem constant byte address 0x4 - core index']
  #allocation1 [shape = 'u32[144,128]{1,0:T(1,128)}', space=vmem, size = 0x12000, scoped, tag = 'internal scratch']
  #allocation2 [shape = 'f32[8,128]{1,0:T(8,128)}', space=vmem, size = 0x1000, scoped, tag = 'scratch operand']
  #allocation3 [shape = 'f32[1]{0:T(128)S(6)}', space=smem, size = 0x200, scoped, tag = 'scoped memory for tpu_custom_call.1']
  %s0 = inlined_call_operand.<no memory space> [shape: f32[1], index: 0, kind: input, shape index: {}]
  %s1 = inlined_call_operand.hbm [shape: bf16[20,128], index: 1, kind: input, shape index: {}]
  %s2 = inlined_call_operand.hbm [shape: bf16[128,128], index: 2, kind: input, shape index: {}]
  %s3 = inlined_call_operand.vmem [shape: f32[1,128], index: 3, kind: input, shape index: {}]
  %s4 = inlined_call_operand.hbm [shape: f32[20,128], index: 4, kind: output, shape index: {}]
  %s5 = sld [smem:[#allocation0]]
  $region65: #{tpu_custom_call.1} parent=0
    _
  %s7 = ssub.s32 1, %s5
  %s8 = scalar_select 0, %s7, %s5
  %9 = sst [smem:[#allocation3]] %s0
  $region1: #{tpu_custom_call.1} parent=0
    #allocation4 [shape = 'u8[4096]{0}', space=vmem, size = 0x1000, scoped, tag = 'input window, operand 1']
    #allocation5 [shape = 's32[2]{0}', space=sflag, size = 0x8, scoped, tag = 'scoped memory for tpu_custom_call.1']
    #allocation6 [shape = 's32[2]{0}', space=sflag, size = 0x8, scoped, tag = 'scoped memory for tpu_custom_call.1']
    #allocation7 [shape = 'u8[32768]{0}', space=vmem, size = 0x8000, scoped, tag = 'input window, operand 2, single buffered']
    #allocation8 [shape = 's32[1]{0}', space=sflag, size = 0x4, scoped, tag = 'scoped memory for tpu_custom_call.1']
    #allocation9 [shape = 'u8[8192]{0}', space=vmem, size = 0x2000, scoped, tag = 'output window, operand 0']
    %10 = vsyncpa [#allocation5], 0
    %s11 = scalar_lea.sflag [#allocation5], 1
    %12 = vsyncpa %s11, 0
    %13 = vsyncpa [#allocation8], 0
    %14 = vsyncpa [#allocation6], 0
    %s15 = scalar_lea.sflag [#allocation6], 1
    %16 = vsyncpa %s15, 0
    loop: start=0, step=1, limit=5
    $region2: #{tpu_custom_call.1} parent=1 // loop_pre_header
      _
    $region3: #{tpu_custom_call.1} parent=1 // loop_header
      %s18 = sphi 0, %s22
      %p19 = scmp.ge.s32.totalorder %s18, 5
      %s25 = sphi 0, %s37
      %s26 = sphi 0, %s33
      %s27 = sphi 0, %s25
      %s28 = sphi 0, %s26
      %s29 = sphi 0, %s27
      %s30 = sphi 0, %s28
      %s38 = sphi 0, %s38
      %s40 = sphi 0, %s38
      %s41 = sphi 0, %s40
      %s55 = sphi 0, %s41
      %s63 = sphi 0, %s65
      %s66 = sphi 0, %s63
      %s67 = sphi 0, %s66
      %s83 = sphi 0, %s67
      %s89 = sphi 0, %s91
      %s92 = sphi 0, %s89
      %s93 = sphi 0, %s92
      %s109 = sphi 0, %s93
      %s113 = sphi 0, %s113
      %s115 = sphi 0, %s113
      %s116 = sphi 0, %s115
      %s130 = sphi 0, %s116
      %s136 = sphi 0, %s138
      %s139 = sphi 0, %s136
      %s140 = sphi 0, %s139
      %s156 = sphi 0, %s140
    $region4: #{tpu_custom_call.1} parent=1 // loop_header_branch
      %21 = sbr.rel (%p19) target = $region8
    $region5: #{tpu_custom_call.1} parent=1 // loop_body
      %s23 = ssub.s32 %s18, 1
      %s24 = ssub.s32 %s18, 2
      %s31 = sadd.s32 1, %s26
      %p32 = scmp.ge.s32.totalorder %s31, 1
      %s33 = scalar_select %p32, 0, %s31
      %s34 = sadd.s32 1, %s25
      %s35 = scalar_select %p32, %s34, %s25
      %p36 = scmp.ge.s32.totalorder %s35, 3
      %s37 = scalar_select %p36, 0, %s35
      %s39 = sadd.s32 %s38, 1
      %p42 = scmp.eq.s32.totalorder %s18, 2
      %p43 = scmp.ne.s32.totalorder %s38, %s40
      %p44 = scmp.eq.s32.totalorder %s18, 0
      %p45 = por %p43, %p44
      %p46 = scmp.ne.s32.totalorder %s38, %s40
      %p47 = scmp.eq.s32.totalorder %s23, 2
      %p48 = por %p46, %p47
      %p49 = scmp.ne.s32.totalorder %s40, %s41
      %p50 = scmp.eq.s32.totalorder %s23, 0
      %p51 = por %p49, %p50
      %p52 = scmp.ne.s32.totalorder %s40, %s41
      %p53 = scmp.eq.s32.totalorder %s24, 2
      %p54 = por %p52, %p53
      %p56 = scmp.ne.s32.totalorder %s41, %s55
      %p57 = scmp.eq.s32.totalorder %s24, 0
      %p58 = por %p56, %p57
      %s59 = ssub.s32 %s25, %s37
      %s60 = ssub.s32 %s26, %s33
      %s61 = sor.u32 %s59, %s60
      %p62 = scmp.eq.s32.totalorder %s61, 0
      %s64 = sadd.s32 %s63, 1
      %s65 = scalar_select %p62, %s63, %s64
      %p68 = pneg %p62
      %p69 = scmp.eq.s32.totalorder %s18, 2
      %p70 = por %p68, %p69
      %p71 = scmp.ne.s32.totalorder %s63, %s66
      %p72 = scmp.eq.s32.totalorder %s18, 0
      %p73 = por %p71, %p72
      %p74 = scmp.ne.s32.totalorder %s63, %s66
      %p75 = scmp.eq.s32.totalorder %s23, 2
      %p76 = por %p74, %p75
      %p77 = scmp.ne.s32.totalorder %s66, %s67
      %p78 = scmp.eq.s32.totalorder %s23, 0
      %p79 = por %p77, %p78
      %p80 = scmp.ne.s32.totalorder %s66, %s67
      %p81 = scmp.eq.s32.totalorder %s24, 2
      %p82 = por %p80, %p81
      %p84 = scmp.ne.s32.totalorder %s67, %s83
      %p85 = scmp.eq.s32.totalorder %s24, 0
      %p86 = por %p84, %p85
      %s87 = ssub.s32 %s26, %s33
      %p88 = scmp.eq.s32.totalorder %s87, 0
      %s90 = sadd.s32 %s89, 1
      %s91 = scalar_select %p88, %s89, %s90
      %p94 = pneg %p88
      %p95 = scmp.eq.s32.totalorder %s18, 2
      %p96 = por %p94, %p95
      %p97 = scmp.ne.s32.totalorder %s89, %s92
      %p98 = scmp.eq.s32.totalorder %s18, 0
      %p99 = por %p97, %p98
      %p100 = scmp.ne.s32.totalorder %s89, %s92
      %p101 = scmp.eq.s32.totalorder %s23, 2
      %p102 = por %p100, %p101
      %p103 = scmp.ne.s32.totalorder %s92, %s93
      %p104 = scmp.eq.s32.totalorder %s23, 0
      %p105 = por %p103, %p104
      %p106 = scmp.ne.s32.totalorder %s92, %s93
      %p107 = scmp.eq.s32.totalorder %s24, 2
      %p108 = por %p106, %p107
      %p110 = scmp.ne.s32.totalorder %s93, %s109
      %p111 = scmp.eq.s32.totalorder %s24, 0
      %p112 = por %p110, %p111
      %s114 = sadd.s32 %s113, 1
      %p117 = scmp.eq.s32.totalorder %s18, 2
      %p118 = scmp.ne.s32.totalorder %s113, %s115
      %p119 = scmp.eq.s32.totalorder %s18, 0
      %p120 = por %p118, %p119
      %p121 = scmp.ne.s32.totalorder %s113, %s115
      %p122 = scmp.eq.s32.totalorder %s23, 2
      %p123 = por %p121, %p122
      %p124 = scmp.ne.s32.totalorder %s115, %s116
      %p125 = scmp.eq.s32.totalorder %s23, 0
      %p126 = por %p124, %p125
      %p127 = scmp.ne.s32.totalorder %s115, %s116
      %p128 = scmp.eq.s32.totalorder %s24, 2
      %p129 = por %p127, %p128
      %p131 = scmp.ne.s32.totalorder %s116, %s130
      %p132 = scmp.eq.s32.totalorder %s24, 0
      %p133 = por %p131, %p132
      %s134 = ssub.s32 %s25, %s37
      %p135 = scmp.eq.s32.totalorder %s134, 0
      %s137 = sadd.s32 %s136, 1
      %s138 = scalar_select %p135, %s136, %s137
      %p141 = pneg %p135
      %p142 = scmp.eq.s32.totalorder %s18, 2
      %p143 = por %p141, %p142
      %p144 = scmp.ne.s32.totalorder %s136, %s139
      %p145 = scmp.eq.s32.totalorder %s18, 0
      %p146 = por %p144, %p145
      %p147 = scmp.ne.s32.totalorder %s136, %s139
      %p148 = scmp.eq.s32.totalorder %s23, 2
      %p149 = por %p147, %p148
      %p150 = scmp.ne.s32.totalorder %s139, %s140
      %p151 = scmp.eq.s32.totalorder %s23, 0
      %p152 = por %p150, %p151
      %p153 = scmp.ne.s32.totalorder %s139, %s140
      %p154 = scmp.eq.s32.totalorder %s24, 2
      %p155 = por %p153, %p154
      %p157 = scmp.ne.s32.totalorder %s140, %s156
      %p158 = scmp.eq.s32.totalorder %s24, 0
      %p159 = por %p157, %p158
      %p160 = scmp.le.s32.totalorder 1, %s18
      %p161 = scmp.lt.s32.totalorder %s18, 4
      %p162 = pnand %p160, %p161
      %p163 = pneg %p162
      // Predicated region
      $region9: #{tpu_custom_call.1} parent=5 // pred_check
        _
      $region10: #{tpu_custom_call.1} parent=5 // pred_check_branch
        %165 = sbr.rel (%p162) target = $region12
      $region11: #{tpu_custom_call.1} parent=5 // pred_region
        %s166 = ssub.s32 %s18, 1
        // Predicated region
        $region13: #{tpu_custom_call.1} parent=11 // pred_check
          %p167 = pneg %p51
        $region14: #{tpu_custom_call.1} parent=11 // pred_check_branch
          %169 = sbr.rel (%p167) target = $region16
        $region15: #{tpu_custom_call.1} parent=11 // pred_region
          _
        $region16: #{tpu_custom_call.1} parent=11 // pred_fallthru
          _
        // Predicated region
        $region17: #{tpu_custom_call.1} parent=11 // pred_check
          %p170 = pneg %p105
        $region18: #{tpu_custom_call.1} parent=11 // pred_check_branch
          %172 = sbr.rel (%p170) target = $region20
        $region19: #{tpu_custom_call.1} parent=11 // pred_region
          %s173 = smul.u32 16, %s28
          %s175 = ssub.s32 1024, 1024
          %176 = vsyncadd [#allocation8], %s175
          %s177 = smul.addr %s173, 64
          %s178 = scalar_lea.hbm %s2, %s177
          %s179 = sshll.u32 [#allocation7], 4
          %s180 = int_to_ptr.vmem [resolvable:$true] %s179
          %185 = dma.hbm_to_vmem [thread:$0]  %s178, 1024, %s180, [#allocation8], 64, 64, 4
        $region20: #{tpu_custom_call.1} parent=11 // pred_fallthru
          _
        // Predicated region
        $region21: #{tpu_custom_call.1} parent=11 // pred_check
          %p186 = pneg %p126
        $region22: #{tpu_custom_call.1} parent=11 // pred_check_branch
          %188 = sbr.rel (%p186) target = $region24
        $region23: #{tpu_custom_call.1} parent=11 // pred_region
          _
        $region24: #{tpu_custom_call.1} parent=11 // pred_fallthru
          _
      $region12: #{tpu_custom_call.1} parent=5 // pred_fallthru
        _
      %p189 = scmp.lt.s32.totalorder %s18, 3
      // Predicated region
      $region25: #{tpu_custom_call.1} parent=5 // pred_check
        %p190 = pneg %p189
      $region26: #{tpu_custom_call.1} parent=5 // pred_check_branch
        %192 = sbr.rel (%p190) target = $region28
      $region27: #{tpu_custom_call.1} parent=5 // pred_region
        // Predicated region
        $region29: #{tpu_custom_call.1} parent=27 // pred_check
          %p193 = pneg %p73
        $region30: #{tpu_custom_call.1} parent=27 // pred_check_branch
          %195 = sbr.rel (%p193) target = $region32
        $region31: #{tpu_custom_call.1} parent=27 // pred_region
          %s196 = sand.u32 %s63, 1
          %s197 = scalar_lea.sflag [#allocation5], %s196
          %s198 = sand.u32 %s63, 1
          %s199 = smul.addr %s198, 4
          %s200 = scalar_lea.vmem [#allocation4], %s199
          %s202 = ssub.s32 64, 64
          %203 = vsyncadd %s197, %s202
          %s204 = sadd.s32 %s26, %s25
          %s205 = smul.addr %s204, 64
          %s206 = scalar_lea.hbm %s1, %s205
          %s208 = sshll.u32 %s200, 4
          %s209 = int_to_ptr.vmem [resolvable:$true] %s208
          %211 = dma.hbm_to_vmem [thread:$0]  %s206, 64, %s209, %s197
        $region32: #{tpu_custom_call.1} parent=27 // pred_fallthru
          _
      $region28: #{tpu_custom_call.1} parent=5 // pred_fallthru
        _
      %p212 = scmp.le.s32.totalorder 1, %s18
      %p213 = scmp.lt.s32.totalorder %s18, 4
      %p214 = pnand %p212, %p213
      %p215 = pneg %p214
      // Predicated region
      $region33: #{tpu_custom_call.1} parent=5 // pred_check
        _
      $region34: #{tpu_custom_call.1} parent=5 // pred_check_branch
        %217 = sbr.rel (%p214) target = $region36
      $region35: #{tpu_custom_call.1} parent=5 // pred_region
        %s218 = ssub.s32 %s18, 1
        %s219 = sand.u32 %s66, 1
        %s220 = scalar_lea.sflag [#allocation5], %s219
        %s221 = sand.u32 %s66, 1
        %s222 = smul.addr %s221, 4
        %s223 = scalar_lea.vmem [#allocation4], %s222
        // Predicated region
        $region37: #{tpu_custom_call.1} parent=35 // pred_check
          %p224 = pneg %p79
        $region38: #{tpu_custom_call.1} parent=35 // pred_check_branch
          %226 = sbr.rel (%p224) target = $region40
        $region39: #{tpu_custom_call.1} parent=35 // pred_region
          %227 = dma.done %s220, 64
        $region40: #{tpu_custom_call.1} parent=35 // pred_fallthru
          _
        // Predicated region
        $region41: #{tpu_custom_call.1} parent=35 // pred_check
          %p228 = pneg %p105
        $region42: #{tpu_custom_call.1} parent=35 // pred_check_branch
          %230 = sbr.rel (%p228) target = $region44
        $region43: #{tpu_custom_call.1} parent=35 // pred_region
          %231 = dma.done [#allocation8], 1024
        $region44: #{tpu_custom_call.1} parent=35 // pred_fallthru
          _
        %p232 = pneg %p51
        %p233 = pneg %p48
        %s234 = sand.u32 %s66, 1
        %s235 = scalar_lea.sflag [#allocation5], %s234
        %s236 = sand.u32 %s66, 1
        %s237 = smul.addr %s236, 4
        %s238 = scalar_lea.vmem [#allocation4], %s237
        %p239 = pneg %p79
        %p240 = pneg %p76
        %p241 = pneg %p105
        %p242 = pneg %p102
        %p243 = pneg %p126
        %p244 = pneg %p123
        %p245 = pneg %p152
        %p246 = pneg %p149
        %s247 = sand.u32 %s139, 1
        %s248 = scalar_lea.sflag [#allocation6], %s247
        %s249 = sand.u32 %s139, 1
        %s250 = smul.addr %s249, 8
        %s251 = scalar_lea.vmem [#allocation9], %s250
        %s252 = smul.u32 16, %s28
        %p254 = scmp.eq.s32.totalorder %s28, 0
        // Predicated region
        $region45: #{tpu_custom_call.1} parent=35 // pred_check
          %p255 = pneg %p254
        $region46: #{tpu_custom_call.1} parent=35 // pred_check_branch
          %257 = sbr.rel (%p255) target = $region48
        $region47: #{tpu_custom_call.1} parent=35 // pred_region
          %258 = vst [vmem:[#allocation2] sm:$0xff] 0.0
        $region48: #{tpu_custom_call.1} parent=35 // pred_fallthru
          _
        %v259 = vld [vmem:[#allocation2] sm:$0xff]
        %v260 = vld [vmem:[%s223] sm:$0xf]
        %v261 = vld [vmem:[#allocation7] sm:$0xf]
        %v262 = vld [vmem:[#allocation7 + $0x4] sm:$0xf]
        %v263 = vld [vmem:[#allocation7 + $0x8] sm:$0xf]
        %v264 = vld [vmem:[#allocation7 + $0xc] sm:$0xf]
        %v265 = vld [vmem:[#allocation7 + $0x10] sm:$0xf]
        %v266 = vld [vmem:[#allocation7 + $0x14] sm:$0xf]
        %v267 = vld [vmem:[#allocation7 + $0x18] sm:$0xf]
        %v268 = vld [vmem:[#allocation7 + $0x1c] sm:$0xf]
        %v269 = vld [vmem:[#allocation7 + $0x20] sm:$0xf]
        %v270 = vld [vmem:[#allocation7 + $0x24] sm:$0xf]
        %v271 = vld [vmem:[#allocation7 + $0x28] sm:$0xf]
        %v272 = vld [vmem:[#allocation7 + $0x2c] sm:$0xf]
        %v273 = vld [vmem:[#allocation7 + $0x30] sm:$0xf]
        %v274 = vld [vmem:[#allocation7 + $0x34] sm:$0xf]
        %v275 = vld [vmem:[#allocation7 + $0x38] sm:$0xf]
        %v276 = vld [vmem:[#allocation7 + $0x3c] sm:$0xf]
        %v293 = vunpack.c.l.b16 %v261
        %v294 = vunpack.c.l.b16 %v262
        %v295 = vunpack.c.l.b16 %v263
        %v296 = vunpack.c.l.b16 %v264
        %v297 = vunpack.c.l.b16 %v265
        %v298 = vunpack.c.l.b16 %v266
        %v299 = vunpack.c.l.b16 %v267
        %v300 = vunpack.c.l.b16 %v268
        %v301 = vunpack.c.l.b16 %v269
        %v302 = vunpack.c.l.b16 %v270
        %v303 = vunpack.c.l.b16 %v271
        %v304 = vunpack.c.l.b16 %v272
        %v305 = vunpack.c.l.b16 %v273
        %v306 = vunpack.c.l.b16 %v274
        %v307 = vunpack.c.l.b16 %v275
        %v308 = vunpack.c.l.b16 %v276
        %v309 = vpack.c.b16 %v294, %v293
        %v310 = vpack.c.b16 %v296, %v295
        %v311 = vpack.c.b16 %v298, %v297
        %v312 = vpack.c.b16 %v300, %v299
        %v313 = vpack.c.b16 %v302, %v301
        %v314 = vpack.c.b16 %v304, %v303
        %v315 = vpack.c.b16 %v306, %v305
        %v316 = vpack.c.b16 %v308, %v307
        %325 = vmatprep.subr.bf16.mxu0 0
        %326 = vmatpush1.bf16.msra.mxu0 %v309
        %327 = vmatprep.subr.bf16.mxu0 0
        %328 = vmatpush1.bf16.msra.mxu0 %v310
        %329 = vmatprep.subr.bf16.mxu0 0
        %330 = vmatpush1.bf16.msra.mxu0 %v311
        %331 = vmatprep.subr.bf16.mxu0 0
        %332 = vmatpush1.bf16.msra.mxu0 %v312
        %333 = vmatprep.subr.bf16.mxu0 0
        %334 = vmatpush1.bf16.msra.mxu0 %v313
        %335 = vmatprep.subr.bf16.mxu0 0
        %336 = vmatpush1.bf16.msra.mxu0 %v314
        %337 = vmatprep.subr.bf16.mxu0 0
        %338 = vmatpush1.bf16.msra.mxu0 %v315
        %339 = vmatprep.subr.bf16.mxu0 0
        %340 = vmatpush1.bf16.msra.mxu0 %v316
        %341 = vmatprep.subr.bf16.mxu0 0
        %342 = vmatpush1.bf16.msra.mxu0 0
        %343 = vmatprep.subr.bf16.mxu0 0
        %344 = vmatpush1.bf16.msra.mxu0 0
        %345 = vmatprep.subr.bf16.mxu0 0
        %346 = vmatpush1.bf16.msra.mxu0 0
        %347 = vmatprep.subr.bf16.mxu0 0
        %348 = vmatpush1.bf16.msra.mxu0 0
        %349 = vmatprep.subr.bf16.mxu0 0
        %350 = vmatpush1.bf16.msra.mxu0 0
        %351 = vmatprep.subr.bf16.mxu0 0
        %352 = vmatpush1.bf16.msra.mxu0 0
        %353 = vmatprep.subr.bf16.mxu0 0
        %354 = vmatpush1.bf16.msra.mxu0 0
        %355 = vmatprep.subr.bf16.mxu0 0
        %356 = vmatpush1.bf16.msra.mxu0 0
        %357 = vmatprep.mubr.bf16.mxu0 0
        %358 = vmatmul.mubr.bf16.gmra.mrb[0].mxu0 %v260
        %v359 = vpop.f32.mrb[0].mxu0
        %v360 = vadd.f32 0.0, %v359
        %v361 = vpop.f32.mrb[0].mxu0
        %v362 = vpop.f32.mrb[0].mxu0
        %v363 = vpop.f32.mrb[0].mxu0
        %364 = vdwg.mxu0
        %v365 = vadd.f32 %v259, %v360
        %366 = vst [vmem:[#allocation2] sm:$0xff] %v365
        // Predicated region
        $region49: #{tpu_custom_call.1} parent=35 // pred_check
          %p367 = pneg %p254
        $region50: #{tpu_custom_call.1} parent=35 // pred_check_branch
          %369 = sbr.rel (%p367) target = $region52
        $region51: #{tpu_custom_call.1} parent=35 // pred_region
          %s370 = sld [smem:[#allocation3]]
          %v371 = vstv %s370
          %v372 = vrcp.pop %v371
          %s373 = vtos %v372
          %v374 = vld [vmem:[#allocation2] sm:$0xff]
          %v375 = vld [vmem:[%s3] sm:$0x1]
          %v377 = vlaneseq
          %v378 = vshrl.u32 %v377, 7
          %v379 = vsub.s32 0, %v378
          %v380 = vrot.slane %v375, %v379
          %v382 = vadd.f32 %v374, %v380
          %v383 = vstv %s373
          %v384 = vmul.f32 %v382, %v383
          %385 = vst [vmem:[%s251] sm:$0xff] %v384
        $region52: #{tpu_custom_call.1} parent=35 // pred_fallthru
          _
        %s386 = sand.u32 %s139, 1
        %s387 = scalar_lea.sflag [#allocation6], %s386
        %s388 = sand.u32 %s139, 1
        %s389 = smul.addr %s388, 8
        %s390 = scalar_lea.vmem [#allocation9], %s389
        // Predicated region
        $region53: #{tpu_custom_call.1} parent=35 // pred_check
          %p391 = pneg %p149
        $region54: #{tpu_custom_call.1} parent=35 // pred_check_branch
          %393 = sbr.rel (%p391) target = $region56
        $region55: #{tpu_custom_call.1} parent=35 // pred_region
          %s395 = ssub.s32 128, 128
          %396 = vsyncadd %s387, %s395
          %s397 = smul.addr %s27, 128
          %s398 = scalar_lea.hbm %s4, %s397
          %s400 = sshll.u32 %s390, 4
          %s401 = int_to_ptr.vmem [resolvable:$true] %s400
          %403 = dma.vmem_to_hbm [thread:$0]  %s401, 128, %s398, %s387
        $region56: #{tpu_custom_call.1} parent=35 // pred_fallthru
          _
      $region36: #{tpu_custom_call.1} parent=5 // pred_fallthru
        _
      %p404 = scmp.le.s32.totalorder 2, %s18
      // Predicated region
      $region57: #{tpu_custom_call.1} parent=5 // pred_check
        %p405 = pneg %p404
      $region58: #{tpu_custom_call.1} parent=5 // pred_check_branch
        %407 = sbr.rel (%p405) target = $region60
      $region59: #{tpu_custom_call.1} parent=5 // pred_region
        %s408 = ssub.s32 %s18, 2
        // Predicated region
        $region61: #{tpu_custom_call.1} parent=59 // pred_check
          %p409 = pneg %p155
        $region62: #{tpu_custom_call.1} parent=59 // pred_check_branch
          %411 = sbr.rel (%p409) target = $region64
        $region63: #{tpu_custom_call.1} parent=59 // pred_region
          %s412 = sand.u32 %s140, 1
          %s413 = scalar_lea.sflag [#allocation6], %s412
          %s414 = sand.u32 %s140, 1
          %s415 = smul.addr %s414, 8
          %s416 = scalar_lea.vmem [#allocation9], %s415
          %417 = dma.done %s413, 128
        $region64: #{tpu_custom_call.1} parent=59 // pred_fallthru
          _
      $region60: #{tpu_custom_call.1} parent=5 // pred_fallthru
        _
    $region6: #{tpu_custom_call.1} parent=1 // loop_footer
      %s22 = sadd.s32 1, %s18
    $region7: #{tpu_custom_call.1} parent=1 // loop_footer_branch
      %17 = sbr.rel target = $region3
    $region8: #{tpu_custom_call.1} parent=1 // loop_exit
      _
    %418 = vsyncpa [#allocation5], 1
    %s419 = scalar_lea.sflag [#allocation5], 1
    %420 = vsyncpa %s419, 1
    %421 = vsyncpa [#allocation8], 1
    %422 = vsyncpa [#allocation6], 1
    %s423 = scalar_lea.sflag [#allocation6], 1
    %424 = vsyncpa %s423, 1

</llo_original>
